<compile_context>
chip_gen: v7x
topology: tpu7x:2x2x1
jax: 0.10.0
libtpu: 0.0.40
codegen_flags: <defaults>
</compile_context>

<pallas_src>
import functools

import jax
import jax.numpy as jnp
from jax import lax
from jax.experimental import pallas as pl
from jax.experimental.pallas import tpu as pltpu

F32 = jnp.float32
BF16 = jnp.bfloat16
LN_EPS = 1e-5

_PARALLEL = pltpu.CompilerParams(dimension_semantics=("parallel",))


def _gelu(x):
    # tanh-approximate GELU (matches the custom GELU class used in BERT-style repos)
    return 0.5 * x * (1.0 + jnp.tanh(0.7978845608028654 * (x + 0.044715 * x * x * x)))


def _layernorm(x, g, b):
    mu = jnp.mean(x, axis=-1, keepdims=True)
    var = jnp.mean((x - mu) ** 2, axis=-1, keepdims=True)
    return (x - mu) * lax.rsqrt(var + LN_EPS) * g + b


def _row_tile(m, cap=256):
    """Largest row tile: the whole array if it fits under `cap`, else the biggest
    multiple-of-8 divisor of m that is <= cap (fallback: one full block)."""
    if m <= cap:
        return m
    for t in range(cap - cap % 8, 7, -8):
        if m % t == 0:
            return t
    return m


# ---------------------------------------------------------------------------
# Fused dense kernel: [optional fused subtraction] -> [optional pre-LayerNorm] ->
# Linear (bf16 MXU, f32 accumulation) -> [optional GELU] -> [optional post-LayerNorm].
# Serves the stand-in BERT encoder, EdgeProj, NodeEdgeFuse, OuterNodeEdgeFuse,
# attn.linear1 and the BiLSTM input projections.  LN params are only passed / DMA'd
# when the corresponding option is enabled.
# ---------------------------------------------------------------------------
def _dense_kernel(*refs, diff, pre_ln, act_gelu, post_ln):
    it = iter(refs)
    x = next(it)[...].astype(F32)
    if diff:
        x = x - next(it)[...].astype(F32)          # fused elementwise subtraction (VPU)
    w_ref = next(it)
    b_ref = next(it)
    if pre_ln:
        g1 = next(it)[...]
        b1 = next(it)[...]
        x = _layernorm(x, g1, b1)
    y = jnp.dot(x.astype(BF16), w_ref[...], preferred_element_type=F32) + b_ref[...]
    if act_gelu:
        y = _gelu(y)
    if post_ln:
        g2 = next(it)[...]
        b2 = next(it)[...]
        y = _layernorm(y, g2, b2)
    o_ref = next(it)
    o_ref[...] = y.astype(o_ref.dtype)


def dense(x2d, w, b, *, sub=None, pre_ln=None, gelu=False, post_ln=None, cap=256):
    M, Din = x2d.shape
    Dout = w.shape[1]
    tm = _row_tile(M, cap)

    def full(r, c):
        return pl.BlockSpec((r, c), lambda i: (0, 0))

    args = [x2d]
    specs = [pl.BlockSpec((tm, Din), lambda i: (i, 0))]
    if sub is not None:
        args.append(sub)
        specs.append(pl.BlockSpec((tm, Din), lambda i: (i, 0)))
    args += [w.astype(BF16), b.reshape(1, Dout)]     # bf16 resident weight halves VMEM/DMA
    specs += [full(Din, Dout), full(1, Dout)]
    if pre_ln is not None:
        g1, b1 = pre_ln
        args += [g1.reshape(1, Din), b1.reshape(1, Din)]
        specs += [full(1, Din), full(1, Din)]
    if post_ln is not None:
        g2, b2 = post_ln
        args += [g2.reshape(1, Dout), b2.reshape(1, Dout)]
        specs += [full(1, Dout), full(1, Dout)]

    kernel = functools.partial(_dense_kernel, diff=sub is not None,
                               pre_ln=pre_ln is not None, act_gelu=gelu,
                               post_ln=post_ln is not None)
    return pl.pallas_call(
        kernel,
        out_shape=jax.ShapeDtypeStruct((M, Dout), x2d.dtype),
        grid=(M // tm,),
        in_specs=specs,
        out_specs=pl.BlockSpec((tm, Dout), lambda i: (i, 0)),
        compiler_params=_PARALLEL,
    )(*args)


# ---------------------------------------------------------------------------
# AttentionLayer pooling kernel: concat-linear2 logits (decomposed into the x and y
# halves of W2), softmax over the in-degree axis, weighted sum of y, residual add, GELU.
#   logit[m,k] = x_lin[m].w2x + y_lin[m,k].w2y + b2
# The scalar b2 lives in SMEM.  The whole op touches only (rows*K, H) elements once,
# so the small K middle dim is kept as-is.
# ---------------------------------------------------------------------------
def _attn_pool_kernel(xp_ref, y_ref, xres_ref, w2x_ref, w2y_ref, b2_ref, o_ref):
    xp = xp_ref[...].astype(F32)                                     # (tm, H)
    y = y_ref[...].astype(F32)                                       # (tm, K, H)
    sx = jnp.dot(xp.astype(BF16), w2x_ref[...], preferred_element_type=F32)   # (tm, 1)
    sy = jnp.sum(y * w2y_ref[...].reshape(1, 1, -1), axis=-1)        # (tm, K)
    logits = sx + sy + b2_ref[0, 0]
    m = jnp.max(logits, axis=1, keepdims=True)
    e = jnp.exp(logits - m)
    p = e / jnp.sum(e, axis=1, keepdims=True)                        # softmax over K
    a = jnp.sum(y * p[:, :, None], axis=1)                           # (tm, H)
    o_ref[...] = _gelu(xres_ref[...].astype(F32) + a).astype(o_ref.dtype)


def attn_pool(x_lin, y_lin3, x_res, w2x, w2y, b2):
    M, H = x_lin.shape
    K = y_lin3.shape[1]
    tm = _row_tile(M, cap=128)
    return pl.pallas_call(
        _attn_pool_kernel,
        out_shape=jax.ShapeDtypeStruct((M, H), x_lin.dtype),
        grid=(M // tm,),
        in_specs=[
            pl.BlockSpec((tm, H), lambda i: (i, 0)),
            pl.BlockSpec((tm, K, H), lambda i: (i, 0, 0)),
            pl.BlockSpec((tm, H), lambda i: (i, 0)),
            pl.BlockSpec((H, 1), lambda i: (0, 0)),
            pl.BlockSpec((1, H), lambda i: (0, 0)),
            pl.BlockSpec(memory_space=pltpu.MemorySpace.SMEM),       # scalar b2
        ],
        out_specs=pl.BlockSpec((tm, H), lambda i: (i, 0)),
        compiler_params=_PARALLEL,
    )(x_lin, y_lin3, x_res, w2x.astype(BF16), w2y, b2.reshape(1, 1))


# ---------------------------------------------------------------------------
# Bidirectional LSTM recurrence (PyTorch gate order i, f, g, o).  The input projection
# x @ W_ih (+ bias) for BOTH directions is precomputed outside as one MXU matmul; the
# kernel only runs the serial  h @ W_hh  recurrence.  grid=(2,) = one direction per grid
# step, marked "parallel" so the two directions can run on separate TensorCores (v7x).
# Direction 1 walks time in reverse in-kernel (no HBM reversal copy); its hidden sequence
# is written back in original time order.
# ---------------------------------------------------------------------------
def _bilstm_rec_kernel(gx_ref, whh_ref, hseq_ref, hfin_ref, cfin_ref, h_s, c_s):
    T = gx_ref.shape[0]
    H = whh_ref.shape[0]
    reverse = pl.program_id(0) == 1
    h_s[...] = jnp.zeros_like(h_s)
    c_s[...] = jnp.zeros_like(c_s)
    whh = whh_ref[...]

    def step(i, carry):
        t = jnp.where(reverse, T - 1 - i, i)
        h = h_s[...]
        c = c_s[...]
        gates = gx_ref[t] + jnp.dot(h, whh, preferred_element_type=F32)   # (B, 4H)
        i_g = jax.nn.sigmoid(gates[:, 0:H])
        f_g = jax.nn.sigmoid(gates[:, H:2 * H])
        g_g = jnp.tanh(gates[:, 2 * H:3 * H])
        o_g = jax.nn.sigmoid(gates[:, 3 * H:4 * H])
        c_new = f_g * c + i_g * g_g
        h_new = o_g * jnp.tanh(c_new)
        h_s[...] = h_new
        c_s[...] = c_new
        hseq_ref[t] = h_new
        return carry

    lax.fori_loop(0, T, step, 0, unroll=True)
    hfin_ref[...] = h_s[...]
    cfin_ref[...] = c_s[...]


def bilstm_layer(x_tbd, p):
    """x_tbd: (T, B, Din) -> (out (T, B, 2H), fwd final hidden (B, H), bwd final hidden (B, H))."""
    T, B, Din = x_tbd.shape
    H = p['whh_f'].shape[0]
    # Hoisted input projection: one (T*B, Din) @ (Din, 8H) matmul covering the whole
    # sequence and both directions; only the tiny (B,H)@(H,4H) recurrence stays serial.
    wih = jnp.concatenate([p['wih_f'], p['wih_b']], axis=1)              # (Din, 8H)
    bias = jnp.concatenate([p['b_f'], p['b_b']], axis=0)                 # (8H,)
    gx = dense(x_tbd.reshape(T * B, Din), wih, bias)                     # (T*B, 8H)
    gx = gx.reshape(T, B, 2, 4 * H).transpose(2, 0, 1, 3)                # (2, T, B, 4H)
    whh = jnp.stack([p['whh_f'], p['whh_b']], axis=0)                    # (2, H, 4H)

    hseq, hfin, _ = pl.pallas_call(
        _bilstm_rec_kernel,
        out_shape=(jax.ShapeDtypeStruct((2, T, B, H), F32),
                   jax.ShapeDtypeStruct((2, B, H), F32),
                   jax.ShapeDtypeStruct((2, B, H), F32)),
        grid=(2,),
        in_specs=[pl.BlockSpec((None, T, B, 4 * H), lambda d: (d, 0, 0, 0)),
                  pl.BlockSpec((None, H, 4 * H), lambda d: (d, 0, 0))],
        out_specs=(pl.BlockSpec((None, T, B, H), lambda d: (d, 0, 0, 0)),
                   pl.BlockSpec((None, B, H), lambda d: (d, 0, 0)),
                   pl.BlockSpec((None, B, H), lambda d: (d, 0, 0))),
        scratch_shapes=[pltpu.VMEM((B, H), F32), pltpu.VMEM((B, H), F32)],
        compiler_params=_PARALLEL,
    )(gx, whh)
    # hseq[1] is already in original time order (backward direction writes slot T-1-i).
    out = jnp.concatenate([hseq[0], hseq[1]], axis=-1)                   # (T, B, 2H)
    return out, hfin[0], hfin[1]


# ---------------------------------------------------------------------------
# Full forward pass.
# ---------------------------------------------------------------------------
def bert_pathwalk_forward(params, batch):
    x = jnp.squeeze(batch['x'], 1)                                       # (B, S)
    x_mask = jnp.squeeze(batch['x_mask'], 1)                             # (B, S)
    B, S = x.shape
    K = batch['prefix_node'].shape[-1]
    bp = params['bert']
    H = bp['emb'].shape[1]
    n_x, n_k = B * S, B * S * K

    # --- stand-in BERT encoder: one launch for all four token streams (shared weights) ---
    # TODO(synk): pretrained BertModel.from_pretrained has no Pallas equivalent; replaced
    # by a deterministic embedding lookup + fused dense/GELU/LayerNorm layer.
    tokens = jnp.concatenate([x.reshape(-1), batch['prefix_node'].reshape(-1),
                              batch['outer_node'].reshape(-1),
                              batch['successor_node'].reshape(-1)])
    masks = jnp.concatenate([x_mask.reshape(-1), batch['prefix_mask'].reshape(-1),
                             batch['outer_mask'].reshape(-1),
                             batch['successor_mask'].reshape(-1)])
    emb = jnp.take(bp['emb'], tokens, axis=0) * masks[:, None].astype(F32)
    enc = dense(emb, bp['enc_w'], bp['enc_b'], gelu=True,
                post_ln=(bp['enc_ln_g'], bp['enc_ln_b']))                # (B*S + 3*B*S*K, H)
    x_embed = enc[:n_x]                                                  # (B*S, H)
    prefix_embed = enc[n_x:n_x + n_k]                                    # (B*S*K, H)
    outer_embed = enc[n_x + n_k:n_x + 2 * n_k]
    succ_embed = enc[n_x + 2 * n_k:]

    # --- EdgeProj over all three difference streams in ONE launch; the elementwise
    #     subtraction is fused into the matmul kernel (no HBM round-trip) ---------------
    x3 = x_embed.reshape(B, S, H)
    x_next = jnp.concatenate([x3[:, 1:, :], x3[:, -1:, :]], axis=1).reshape(n_x, H)
    # (x_next - x_embed) at position S-1 is exactly zero == the reference's zero last row.
    minuend = jnp.concatenate([x_next, outer_embed, succ_embed], axis=0)
    subtrahend = jnp.concatenate([x_embed, prefix_embed, outer_embed], axis=0)
    ep = params['edgeproj']
    edges = dense(minuend, ep['w'], ep['b'], gelu=True, sub=subtrahend)
    x_edges = edges[:n_x]
    edge1 = edges[n_x:n_x + n_k]
    edge2 = edges[n_x + n_k:]

    # --- NodeEdgeFuse / OuterNodeEdgeFuse ------------------------------------------------
    nef = params['nef']
    x_sum = dense(jnp.concatenate([x_embed, x_edges], axis=-1), nef['w'], nef['b'],
                  gelu=True, post_ln=(nef['ln_g'], nef['ln_b']))         # (B*S, H)
    onef = params['onef']
    nbhd = dense(jnp.concatenate([edge1, outer_embed, edge2], axis=-1),
                 onef['w'], onef['b'], gelu=True,
                 post_ln=(onef['ln_g'], onef['ln_b']))                   # (B*S*K, H)

    # --- AttentionLayer: shared linear1 over x and neighbours in one launch --------------
    at = params['attn']
    lin = dense(jnp.concatenate([x_sum, nbhd], axis=0), at['w1'], at['b1'],
                pre_ln=(at['ln_g'], at['ln_b']))
    x_lin = lin[:n_x]
    y_lin = lin[n_x:].reshape(n_x, K, H)
    x_sum2 = attn_pool(x_lin, y_lin, x_sum, at['w2x'], at['w2y'], at['b2'])   # (B*S, H)

    # --- 2-layer bidirectional LSTM; h[2], h[3] = layer-2 forward / backward finals -------
    # TODO(synk): DynamicRNN variable-length packing (xlen) not reproduced; sequences are full length.
    x_tbd = jnp.transpose(x_sum2.reshape(B, S, H), (1, 0, 2))            # (S, B, H)
    out1, _, _ = bilstm_layer(x_tbd, params['lstm1'])                    # (S, B, 2H)
    _, h2f, h2b = bilstm_layer(out1, params['lstm2'])

    # --- classification head: plain XLA (num_class=2 output is not lane-dense) -----------
    head = params['head']
    logit = jnp.concatenate([h2f, h2b], axis=1) @ head['w'] + head['b']
    return jax.nn.softmax(logit, axis=1)


def init_params(key, vocab=64, H=128, num_class=2):
    keys = iter(jax.random.split(key, 40))

    def w(shape, scale=0.05):
        return scale * jax.random.normal(next(keys), shape, F32)

    def lstm_dir_params(din):
        return w((din, 4 * H)), w((H, 4 * H)), jnp.zeros((4 * H,), F32)

    def lstm_layer_params(din):
        wf, uf, bf = lstm_dir_params(din)
        wb, ub, bb = lstm_dir_params(din)
        return {'wih_f': wf, 'whh_f': uf, 'b_f': bf,
                'wih_b': wb, 'whh_b': ub, 'b_b': bb}

    return {
        'bert': {'emb': w((vocab, H), 0.1), 'enc_w': w((H, H)),
                 'enc_b': jnp.zeros((H,), F32),
                 'enc_ln_g': jnp.ones((H,), F32), 'enc_ln_b': jnp.zeros((H,), F32)},
        'edgeproj': {'w': w((H, H)), 'b': jnp.zeros((H,), F32)},
        'nef': {'w': w((2 * H, H)), 'b': jnp.zeros((H,), F32),
                'ln_g': jnp.ones((H,), F32), 'ln_b': jnp.zeros((H,), F32)},
        'onef': {'w': w((3 * H, H)), 'b': jnp.zeros((H,), F32),
                 'ln_g': jnp.ones((H,), F32), 'ln_b': jnp.zeros((H,), F32)},
        'attn': {'ln_g': jnp.ones((H,), F32), 'ln_b': jnp.zeros((H,), F32),
                 'w1': w((H, H)), 'b1': jnp.zeros((H,), F32),
                 'w2x': w((H, 1)), 'w2y': w((1, H)), 'b2': jnp.zeros((1, 1), F32)},
        'lstm1': lstm_layer_params(H),
        'lstm2': lstm_layer_params(2 * H),
        'head': {'w': w((2 * H, num_class)), 'b': jnp.zeros((num_class,), F32)},
    }


if __name__ == "__main__":
    B, S, K, H, V, NC = 2, 8, 4, 128, 64, 2
    key = jax.random.PRNGKey(0)
    pkey, xkey, k1, k2, k3 = jax.random.split(key, 5)
    params = init_params(pkey, vocab=V, H=H, num_class=NC)
    batch = {
        'x': jax.random.randint(xkey, (B, 1, S), 0, V, jnp.int32),
        'xlen': jnp.full((B,), S, jnp.int32),
        'x_mask': jnp.ones((B, 1, S), jnp.int32),
        'prefix_node': jax.random.randint(k1, (B, S, K), 0, V, jnp.int32),
        'prefix_mask': jnp.ones((B, S, K), jnp.int32),
        'outer_node': jax.random.randint(k2, (B, S, K), 0, V, jnp.int32),
        'outer_mask': jnp.ones((B, S, K), jnp.int32),
        'successor_node': jax.random.randint(k3, (B, S, K), 0, V, jnp.int32),
        'successor_mask': jnp.ones((B, S, K), jnp.int32),
    }
    prob = jax.block_until_ready(bert_pathwalk_forward(params, batch))
    assert prob.shape == (B, NC)
    assert bool(jnp.all(jnp.isfinite(prob)))
    print("KERNEL_OK")
</pallas_src>

<mosaic_0001>
module attributes {stable_mosaic.version = 11 : i64} {
  func.func @_dense_kernel(%arg0: i32, %arg1: memref<208x128xf32, #tpu.memory_space<vmem>>, %arg2: memref<128x128xbf16, #tpu.memory_space<vmem>>, %arg3: memref<1x128xf32, #tpu.memory_space<vmem>>, %arg4: memref<1x128xf32, #tpu.memory_space<vmem>>, %arg5: memref<1x128xf32, #tpu.memory_space<vmem>>, %arg6: memref<208x128xf32, #tpu.memory_space<vmem>>) attributes {dimension_semantics = [#tpu.dimension_semantics<parallel>], iteration_bounds = array<i64: 1>, scalar_prefetch = 0 : i64, scratch_operands = 0 : i64, tpu.core_type = #tpu.core_type<tc>, window_params = [{transform_indices = @transform_0, window_bounds = array<i64: 208, 128>}, {pipeline_mode = #tpu.pipeline_mode<synchronous>, transform_indices = @transform_1, window_bounds = array<i64: 128, 128>}, {pipeline_mode = #tpu.pipeline_mode<synchronous>, transform_indices = @transform_2, window_bounds = array<i64: 1, 128>}, {pipeline_mode = #tpu.pipeline_mode<synchronous>, transform_indices = @transform_3, window_bounds = array<i64: 1, 128>}, {pipeline_mode = #tpu.pipeline_mode<synchronous>, transform_indices = @transform_4, window_bounds = array<i64: 1, 128>}, {transform_indices = @transform_5, window_bounds = array<i64: 208, 128>}]} {
    %c0 = arith.constant 0 : index
    %c0_0 = arith.constant 0 : index
    %0 = vector.load %arg1[%c0, %c0_0] : memref<208x128xf32, #tpu.memory_space<vmem>>, vector<208x128xf32>
    %1 = arith.truncf %0 : vector<208x128xf32> to vector<208x128xbf16>
    %c0_1 = arith.constant 0 : index
    %c0_2 = arith.constant 0 : index
    %2 = vector.load %arg2[%c0_1, %c0_2] : memref<128x128xbf16, #tpu.memory_space<vmem>>, vector<128x128xbf16>
    %cst = arith.constant dense<0.000000e+00> : vector<208x128xf32>
    %3 = tpu.matmul %1, %2, %cst {dimension_numbers = #tpu.dot_dimension_numbers<[1], [0], [0], [1], [0, 0, 1, 1], [], []>} : vector<208x128xbf16>, vector<128x128xbf16>, vector<208x128xf32> -> vector<208x128xf32>
    %c0_3 = arith.constant 0 : index
    %c0_4 = arith.constant 0 : index
    %4 = vector.load %arg3[%c0_3, %c0_4] : memref<1x128xf32, #tpu.memory_space<vmem>>, vector<1x128xf32>
    %5 = vector.broadcast %4 : vector<1x128xf32> to vector<208x128xf32>
    %6 = arith.addf %3, %5 : vector<208x128xf32>
    %cst_5 = arith.constant 5.000000e-01 : f32
    %7 = vector.broadcast %cst_5 : f32 to vector<208x128xf32>
    %8 = arith.mulf %7, %6 : vector<208x128xf32>
    %cst_6 = arith.constant 4.471500e-02 : f32
    %9 = vector.broadcast %cst_6 : f32 to vector<208x128xf32>
    %10 = arith.mulf %9, %6 : vector<208x128xf32>
    %11 = arith.mulf %10, %6 : vector<208x128xf32>
    %12 = arith.mulf %11, %6 : vector<208x128xf32>
    %13 = arith.addf %6, %12 : vector<208x128xf32>
    %cst_7 = arith.constant 0.797884583 : f32
    %14 = vector.broadcast %cst_7 : f32 to vector<208x128xf32>
    %15 = arith.mulf %14, %13 : vector<208x128xf32>
    %16 = math.tanh %15 : vector<208x128xf32>
    %cst_8 = arith.constant 1.000000e+00 : f32
    %17 = vector.broadcast %cst_8 : f32 to vector<208x128xf32>
    %18 = arith.addf %17, %16 : vector<208x128xf32>
    %19 = arith.mulf %8, %18 : vector<208x128xf32>
    %c0_9 = arith.constant 0 : index
    %c0_10 = arith.constant 0 : index
    %20 = vector.load %arg4[%c0_9, %c0_10] : memref<1x128xf32, #tpu.memory_space<vmem>>, vector<1x128xf32>
    %c0_11 = arith.constant 0 : index
    %c0_12 = arith.constant 0 : index
    %21 = vector.load %arg5[%c0_11, %c0_12] : memref<1x128xf32, #tpu.memory_space<vmem>>, vector<1x128xf32>
    %cst_13 = arith.constant dense<0.000000e+00> : vector<208xf32>
    %22 = vector.multi_reduction <add>, %19, %cst_13 [1] : vector<208x128xf32> to vector<208xf32>
    %23 = vector.shape_cast %22 : vector<208xf32> to vector<208x1xf32>
    %cst_14 = arith.constant 1.280000e+02 : f32
    %24 = vector.broadcast %cst_14 : f32 to vector<208x1xf32>
    %25 = arith.divf %23, %24 : vector<208x1xf32>
    %26 = vector.broadcast %25 : vector<208x1xf32> to vector<208x128xf32>
    %27 = arith.subf %19, %26 : vector<208x128xf32>
    %28 = arith.mulf %27, %27 : vector<208x128xf32>
    %cst_15 = arith.constant dense<0.000000e+00> : vector<208xf32>
    %29 = vector.multi_reduction <add>, %28, %cst_15 [1] : vector<208x128xf32> to vector<208xf32>
    %30 = vector.shape_cast %29 : vector<208xf32> to vector<208x1xf32>
    %cst_16 = arith.constant 1.280000e+02 : f32
    %31 = vector.broadcast %cst_16 : f32 to vector<208x1xf32>
    %32 = arith.divf %30, %31 : vector<208x1xf32>
    %33 = vector.broadcast %25 : vector<208x1xf32> to vector<208x128xf32>
    %34 = arith.subf %19, %33 : vector<208x128xf32>
    %cst_17 = arith.constant 9.99999974E-6 : f32
    %35 = vector.broadcast %cst_17 : f32 to vector<208x1xf32>
    %36 = arith.addf %32, %35 : vector<208x1xf32>
    %37 = math.rsqrt %36 : vector<208x1xf32>
    %38 = vector.broadcast %37 : vector<208x1xf32> to vector<208x128xf32>
    %39 = arith.mulf %34, %38 : vector<208x128xf32>
    %40 = vector.broadcast %20 : vector<1x128xf32> to vector<208x128xf32>
    %41 = arith.mulf %39, %40 : vector<208x128xf32>
    %42 = vector.broadcast %21 : vector<1x128xf32> to vector<208x128xf32>
    %43 = arith.addf %41, %42 : vector<208x128xf32>
    %c0_18 = arith.constant 0 : index
    %c0_19 = arith.constant 0 : index
    %44 = vector.load %arg6[%c0_18, %c0_19] : memref<208x128xf32, #tpu.memory_space<vmem>>, vector<208x128xf32>
    tpu.vector_store %arg6[%c0_18, %c0_19], %43 {strides = array<i32>} : memref<208x128xf32, #tpu.memory_space<vmem>>, vector<208x128xf32>,
    return
  }
  func.func @transform_0(%arg0: i32) -> (i32, i32) {
    %c0_i32 = arith.constant 0 : i32
    %c0_i32_0 = arith.constant 0 : i32
    return %arg0, %c0_i32 : i32, i32
  }
  func.func @transform_1(%arg0: i32) -> (i32, i32) {
    %c0_i32 = arith.constant 0 : i32
    %c0_i32_0 = arith.constant 0 : i32
    %c0_i32_1 = arith.constant 0 : i32
    return %c0_i32, %c0_i32_0 : i32, i32
  }
  func.func @transform_2(%arg0: i32) -> (i32, i32) {
    %c0_i32 = arith.constant 0 : i32
    %c0_i32_0 = arith.constant 0 : i32
    %c0_i32_1 = arith.constant 0 : i32
    return %c0_i32, %c0_i32_0 : i32, i32
  }
  func.func @transform_3(%arg0: i32) -> (i32, i32) {
    %c0_i32 = arith.constant 0 : i32
    %c0_i32_0 = arith.constant 0 : i32
    %c0_i32_1 = arith.constant 0 : i32
    return %c0_i32, %c0_i32_0 : i32, i32
  }
  func.func @transform_4(%arg0: i32) -> (i32, i32) {
    %c0_i32 = arith.constant 0 : i32
    %c0_i32_0 = arith.constant 0 : i32
    %c0_i32_1 = arith.constant 0 : i32
    return %c0_i32, %c0_i32_0 : i32, i32
  }
  func.func @transform_5(%arg0: i32) -> (i32, i32) {
    %c0_i32 = arith.constant 0 : i32
    %c0_i32_0 = arith.constant 0 : i32
    return %arg0, %c0_i32 : i32, i32
  }
}

</mosaic_0001>

<llo_original>
// kernel: tpu_custom_call.1
$region0: #{tpu_custom_call.1}
  #allocation0 [shape = 'u32[]', space=smem, size = 0x4, offset = 0x4, fixed_abs, tag = 'smem constant byte address 0x4 - core index']
  #allocation1 [shape = 'u32[144,128]{1,0:T(1,128)}', space=vmem, size = 0x12000, scoped, tag = 'internal scratch']
  %s0 = inlined_call_operand.hbm [shape: f32[208,128], index: 0, kind: input, shape index: {}]
  %s1 = inlined_call_operand.hbm [shape: bf16[128,128], index: 1, kind: input, shape index: {}]
  %s2 = inlined_call_operand.vmem [shape: f32[1,128], index: 2, kind: input, shape index: {}]
  %s3 = inlined_call_operand.vmem [shape: f32[1,128], index: 3, kind: input, shape index: {}]
  %s4 = inlined_call_operand.vmem [shape: f32[1,128], index: 4, kind: input, shape index: {}]
  %s5 = inlined_call_operand.hbm [shape: f32[208,128], index: 5, kind: output, shape index: {}]
  %s6 = sld [smem:[#allocation0]]
  $region38: #{tpu_custom_call.1} parent=0
    _
  %s8 = ssub.s32 1, %s6
  %s9 = scalar_select 0, %s8, %s6
  $region1: #{tpu_custom_call.1} parent=0
    #allocation2 [shape = 'u8[106496]{0}', space=vmem, size = 0x1a000, scoped, tag = 'input window, operand 0, single buffered']
    #allocation3 [shape = 's32[1]{0}', space=sflag, size = 0x4, scoped, tag = 'scoped memory for tpu_custom_call.1']
    #allocation4 [shape = 's32[1]{0}', space=sflag, size = 0x4, scoped, tag = 'scoped memory for tpu_custom_call.1']
    #allocation5 [shape = 'u8[32768]{0}', space=vmem, size = 0x8000, scoped, tag = 'input window, operand 1, single buffered']
    #allocation6 [shape = 's32[1]{0}', space=sflag, size = 0x4, scoped, tag = 'scoped memory for tpu_custom_call.1']
    #allocation7 [shape = 'u8[106496]{0}', space=vmem, size = 0x1a000, scoped, tag = 'output window, operand 0, single buffered']
    %10 = vsyncpa [#allocation3], 0
    %11 = vsyncpa [#allocation6], 0
    %12 = vsyncpa [#allocation4], 0
    // Predicated region
    $region2: #{tpu_custom_call.1} parent=1 // pred_check
      _
    $region3: #{tpu_custom_call.1} parent=1 // pred_check_branch
      %14 = sbr.rel (0) target = $region5
    $region4: #{tpu_custom_call.1} parent=1 // pred_region
      %s16 = ssub.s32 3328, 3328
      %17 = vsyncadd [#allocation3], %s16
      %s18 = sshll.u32 [#allocation2], 4
      %s19 = int_to_ptr.vmem [resolvable:$true] %s18
      %24 = dma.hbm_to_vmem [thread:$0]  %s0, 3328, %s19, [#allocation3], 128, 128, 8
    $region5: #{tpu_custom_call.1} parent=1 // pred_fallthru
      _
    // Predicated region
    $region6: #{tpu_custom_call.1} parent=1 // pred_check
      _
    $region7: #{tpu_custom_call.1} parent=1 // pred_check_branch
      %26 = sbr.rel (0) target = $region9
    $region8: #{tpu_custom_call.1} parent=1 // pred_region
      %s28 = ssub.s32 1024, 1024
      %29 = vsyncadd [#allocation6], %s28
      %s30 = sshll.u32 [#allocation5], 4
      %s31 = int_to_ptr.vmem [resolvable:$true] %s30
      %36 = dma.hbm_to_vmem [thread:$0]  %s1, 1024, %s31, [#allocation6], 64, 64, 4
    $region9: #{tpu_custom_call.1} parent=1 // pred_fallthru
      _
    // Predicated region
    $region10: #{tpu_custom_call.1} parent=1 // pred_check
      _
    $region11: #{tpu_custom_call.1} parent=1 // pred_check_branch
      %38 = sbr.rel (0) target = $region13
    $region12: #{tpu_custom_call.1} parent=1 // pred_region
      _
    $region13: #{tpu_custom_call.1} parent=1 // pred_fallthru
      _
    // Predicated region
    $region14: #{tpu_custom_call.1} parent=1 // pred_check
      _
    $region15: #{tpu_custom_call.1} parent=1 // pred_check_branch
      %40 = sbr.rel (0) target = $region17
    $region16: #{tpu_custom_call.1} parent=1 // pred_region
      _
    $region17: #{tpu_custom_call.1} parent=1 // pred_fallthru
      _
    // Predicated region
    $region18: #{tpu_custom_call.1} parent=1 // pred_check
      _
    $region19: #{tpu_custom_call.1} parent=1 // pred_check_branch
      %42 = sbr.rel (0) target = $region21
    $region20: #{tpu_custom_call.1} parent=1 // pred_region
      _
    $region21: #{tpu_custom_call.1} parent=1 // pred_fallthru
      _
    // Predicated region
    $region22: #{tpu_custom_call.1} parent=1 // pred_check
      _
    $region23: #{tpu_custom_call.1} parent=1 // pred_check_branch
      %44 = sbr.rel (0) target = $region25
    $region24: #{tpu_custom_call.1} parent=1 // pred_region
      %45 = dma.done [#allocation3], 3328
    $region25: #{tpu_custom_call.1} parent=1 // pred_fallthru
      _
    // Predicated region
    $region26: #{tpu_custom_call.1} parent=1 // pred_check
      _
    $region27: #{tpu_custom_call.1} parent=1 // pred_check_branch
      %47 = sbr.rel (0) target = $region29
    $region28: #{tpu_custom_call.1} parent=1 // pred_region
      %48 = dma.done [#allocation6], 1024
    $region29: #{tpu_custom_call.1} parent=1 // pred_fallthru
      _
    %v50 = vld [vmem:[#allocation2] sm:$0xff]
    %v51 = vld [vmem:[#allocation2 + $0x8] sm:$0xff]
    %v52 = vld [vmem:[#allocation2 + $0x10] sm:$0xff]
    %v53 = vld [vmem:[#allocation2 + $0x18] sm:$0xff]
    %v54 = vld [vmem:[#allocation2 + $0x20] sm:$0xff]
    %v55 = vld [vmem:[#allocation2 + $0x28] sm:$0xff]
    %v56 = vld [vmem:[#allocation2 + $0x30] sm:$0xff]
    %v57 = vld [vmem:[#allocation2 + $0x38] sm:$0xff]
    %v58 = vld [vmem:[#allocation2 + $0x40] sm:$0xff]
    %v59 = vld [vmem:[#allocation2 + $0x48] sm:$0xff]
    %v60 = vld [vmem:[#allocation2 + $0x50] sm:$0xff]
    %v61 = vld [vmem:[#allocation2 + $0x58] sm:$0xff]
    %v62 = vld [vmem:[#allocation2 + $0x60] sm:$0xff]
    %v63 = vld [vmem:[#allocation2 + $0x68] sm:$0xff]
    %v64 = vld [vmem:[#allocation2 + $0x70] sm:$0xff]
    %v65 = vld [vmem:[#allocation2 + $0x78] sm:$0xff]
    %v66 = vld [vmem:[#allocation2 + $0x80] sm:$0xff]
    %v67 = vld [vmem:[#allocation2 + $0x88] sm:$0xff]
    %v68 = vld [vmem:[#allocation2 + $0x90] sm:$0xff]
    %v69 = vld [vmem:[#allocation2 + $0x98] sm:$0xff]
    %v70 = vld [vmem:[#allocation2 + $0xa0] sm:$0xff]
    %v71 = vld [vmem:[#allocation2 + $0xa8] sm:$0xff]
    %v72 = vld [vmem:[#allocation2 + $0xb0] sm:$0xff]
    %v73 = vld [vmem:[#allocation2 + $0xb8] sm:$0xff]
    %v74 = vld [vmem:[#allocation2 + $0xc0] sm:$0xff]
    %v75 = vld [vmem:[#allocation2 + $0xc8] sm:$0xff]
    %v76 = vpack.c.bf16 %v51, %v50
    %v77 = vpack.c.bf16 %v53, %v52
    %v78 = vpack.c.bf16 %v55, %v54
    %v79 = vpack.c.bf16 %v57, %v56
    %v80 = vpack.c.bf16 %v59, %v58
    %v81 = vpack.c.bf16 %v61, %v60
    %v82 = vpack.c.bf16 %v63, %v62
    %v83 = vpack.c.bf16 %v65, %v64
    %v84 = vpack.c.bf16 %v67, %v66
    %v85 = vpack.c.bf16 %v69, %v68
    %v86 = vpack.c.bf16 %v71, %v70
    %v87 = vpack.c.bf16 %v73, %v72
    %v88 = vpack.c.bf16 %v75, %v74
    %v89 = vld [vmem:[#allocation5] sm:$0xf]
    %v90 = vld [vmem:[#allocation5 + $0x4] sm:$0xf]
    %v91 = vld [vmem:[#allocation5 + $0x8] sm:$0xf]
    %v92 = vld [vmem:[#allocation5 + $0xc] sm:$0xf]
    %v93 = vld [vmem:[#allocation5 + $0x10] sm:$0xf]
    %v94 = vld [vmem:[#allocation5 + $0x14] sm:$0xf]
    %v95 = vld [vmem:[#allocation5 + $0x18] sm:$0xf]
    %v96 = vld [vmem:[#allocation5 + $0x1c] sm:$0xf]
    %v97 = vld [vmem:[#allocation5 + $0x20] sm:$0xf]
    %v98 = vld [vmem:[#allocation5 + $0x24] sm:$0xf]
    %v99 = vld [vmem:[#allocation5 + $0x28] sm:$0xf]
    %v100 = vld [vmem:[#allocation5 + $0x2c] sm:$0xf]
    %v101 = vld [vmem:[#allocation5 + $0x30] sm:$0xf]
    %v102 = vld [vmem:[#allocation5 + $0x34] sm:$0xf]
    %v103 = vld [vmem:[#allocation5 + $0x38] sm:$0xf]
    %v104 = vld [vmem:[#allocation5 + $0x3c] sm:$0xf]
    %v105 = vld [vmem:[%s2] sm:$0x1]
    %v107 = vlaneseq
    %v108 = vshrl.u32 %v107, 7
    %v109 = vsub.s32 0, %v108
    %v110 = vrot.slane %v105, %v109
    %v128 = vunpack.c.l.b16 %v89
    %v129 = vunpack.c.l.b16 %v90
    %v130 = vunpack.c.l.b16 %v91
    %v131 = vunpack.c.l.b16 %v92
    %v132 = vunpack.c.l.b16 %v93
    %v133 = vunpack.c.l.b16 %v94
    %v134 = vunpack.c.l.b16 %v95
    %v135 = vunpack.c.l.b16 %v96
    %v136 = vunpack.c.l.b16 %v97
    %v137 = vunpack.c.l.b16 %v98
    %v138 = vunpack.c.l.b16 %v99
    %v139 = vunpack.c.l.b16 %v100
    %v140 = vunpack.c.l.b16 %v101
    %v141 = vunpack.c.l.b16 %v102
    %v142 = vunpack.c.l.b16 %v103
    %v143 = vunpack.c.l.b16 %v104
    %v144 = vpack.c.b16 %v129, %v128
    %v145 = vpack.c.b16 %v131, %v130
    %v146 = vpack.c.b16 %v133, %v132
    %v147 = vpack.c.b16 %v135, %v134
    %v148 = vpack.c.b16 %v137, %v136
    %v149 = vpack.c.b16 %v139, %v138
    %v150 = vpack.c.b16 %v141, %v140
    %v151 = vpack.c.b16 %v143, %v142
    %160 = vmatprep.subr.bf16.mxu0 0
    %161 = vmatpush1.bf16.msra.mxu0 %v144
    %162 = vmatprep.subr.bf16.mxu0 0
    %163 = vmatpush1.bf16.msra.mxu0 %v145
    %164 = vmatprep.subr.bf16.mxu0 0
    %165 = vmatpush1.bf16.msra.mxu0 %v146
    %166 = vmatprep.subr.bf16.mxu0 0
    %167 = vmatpush1.bf16.msra.mxu0 %v147
    %168 = vmatprep.subr.bf16.mxu0 0
    %169 = vmatpush1.bf16.msra.mxu0 %v148
    %170 = vmatprep.subr.bf16.mxu0 0
    %171 = vmatpush1.bf16.msra.mxu0 %v149
    %172 = vmatprep.subr.bf16.mxu0 0
    %173 = vmatpush1.bf16.msra.mxu0 %v150
    %174 = vmatprep.subr.bf16.mxu0 0
    %175 = vmatpush1.bf16.msra.mxu0 %v151
    %176 = vmatprep.subr.bf16.mxu0 0
    %177 = vmatpush1.bf16.msra.mxu0 0
    %178 = vmatprep.subr.bf16.mxu0 0
    %179 = vmatpush1.bf16.msra.mxu0 0
    %180 = vmatprep.subr.bf16.mxu0 0
    %181 = vmatpush1.bf16.msra.mxu0 0
    %182 = vmatprep.subr.bf16.mxu0 0
    %183 = vmatpush1.bf16.msra.mxu0 0
    %184 = vmatprep.subr.bf16.mxu0 0
    %185 = vmatpush1.bf16.msra.mxu0 0
    %186 = vmatprep.subr.bf16.mxu0 0
    %187 = vmatpush1.bf16.msra.mxu0 0
    %188 = vmatprep.subr.bf16.mxu0 0
    %189 = vmatpush1.bf16.msra.mxu0 0
    %190 = vmatprep.subr.bf16.mxu0 0
    %191 = vmatpush1.bf16.msra.mxu0 0
    %192 = vmatprep.mubr.bf16.mxu0 0
    %193 = vmatmul.mubr.bf16.gmra.mrb[0].mxu0 %v76
    %v194 = vpop.f32.mrb[0].mxu0
    %v195 = vadd.f32 %v110, %v194
    %v196 = vpop.f32.mrb[0].mxu0
    %v197 = vpop.f32.mrb[0].mxu0
    %v198 = vadd.f32 %v110, %v197
    %v199 = vpop.f32.mrb[0].mxu0
    %200 = vmatprep.mubr.bf16.mxu0 0
    %201 = vmatmul.mubr.bf16.gmra.mrb[0].mxu0 %v77
    %v202 = vpop.f32.mrb[0].mxu0
    %v203 = vadd.f32 %v110, %v202
    %v204 = vpop.f32.mrb[0].mxu0
    %v205 = vpop.f32.mrb[0].mxu0
    %v206 = vadd.f32 %v110, %v205
    %v207 = vpop.f32.mrb[0].mxu0
    %208 = vmatprep.mubr.bf16.mxu0 0
    %209 = vmatmul.mubr.bf16.gmra.mrb[0].mxu0 %v78
    %v210 = vpop.f32.mrb[0].mxu0
    %v211 = vadd.f32 %v110, %v210
    %v212 = vpop.f32.mrb[0].mxu0
    %v213 = vpop.f32.mrb[0].mxu0
    %v214 = vadd.f32 %v110, %v213
    %v215 = vpop.f32.mrb[0].mxu0
    %216 = vmatprep.mubr.bf16.mxu0 0
    %217 = vmatmul.mubr.bf16.gmra.mrb[0].mxu0 %v79
    %v218 = vpop.f32.mrb[0].mxu0
    %v219 = vadd.f32 %v110, %v218
    %v220 = vpop.f32.mrb[0].mxu0
    %v221 = vpop.f32.mrb[0].mxu0
    %v222 = vadd.f32 %v110, %v221
    %v223 = vpop.f32.mrb[0].mxu0
    %224 = vmatprep.mubr.bf16.mxu0 0
    %225 = vmatmul.mubr.bf16.gmra.mrb[0].mxu0 %v80
    %v226 = vpop.f32.mrb[0].mxu0
    %v227 = vadd.f32 %v110, %v226
    %v228 = vpop.f32.mrb[0].mxu0
    %v229 = vpop.f32.mrb[0].mxu0
    %v230 = vadd.f32 %v110, %v229
    %v231 = vpop.f32.mrb[0].mxu0
    %232 = vmatprep.mubr.bf16.mxu0 0
    %233 = vmatmul.mubr.bf16.gmra.mrb[0].mxu0 %v81
    %v234 = vpop.f32.mrb[0].mxu0
    %v235 = vadd.f32 %v110, %v234
    %v236 = vpop.f32.mrb[0].mxu0
    %v237 = vpop.f32.mrb[0].mxu0
    %v238 = vadd.f32 %v110, %v237
    %v239 = vpop.f32.mrb[0].mxu0
    %240 = vmatprep.mubr.bf16.mxu0 0
    %241 = vmatmul.mubr.bf16.gmra.mrb[0].mxu0 %v82
    %v242 = vpop.f32.mrb[0].mxu0
    %v243 = vadd.f32 %v110, %v242
    %v244 = vpop.f32.mrb[0].mxu0
    %v245 = vpop.f32.mrb[0].mxu0
    %v246 = vadd.f32 %v110, %v245
    %v247 = vpop.f32.mrb[0].mxu0
    %248 = vmatprep.mubr.bf16.mxu0 0
    %249 = vmatmul.mubr.bf16.gmra.mrb[0].mxu0 %v83
    %v250 = vpop.f32.mrb[0].mxu0
    %v251 = vadd.f32 %v110, %v250
    %v252 = vpop.f32.mrb[0].mxu0
    %v253 = vpop.f32.mrb[0].mxu0
    %v254 = vadd.f32 %v110, %v253
    %v255 = vpop.f32.mrb[0].mxu0
    %256 = vmatprep.mubr.bf16.mxu0 0
    %257 = vmatmul.mubr.bf16.gmra.mrb[0].mxu0 %v84
    %v258 = vpop.f32.mrb[0].mxu0
    %v259 = vadd.f32 %v110, %v258
    %v260 = vpop.f32.mrb[0].mxu0
    %v261 = vpop.f32.mrb[0].mxu0
    %v262 = vadd.f32 %v110, %v261
    %v263 = vpop.f32.mrb[0].mxu0
    %264 = vmatprep.mubr.bf16.mxu0 0
    %265 = vmatmul.mubr.bf16.gmra.mrb[0].mxu0 %v85
    %v266 = vpop.f32.mrb[0].mxu0
    %v267 = vadd.f32 %v110, %v266
    %v268 = vpop.f32.mrb[0].mxu0
    %v269 = vpop.f32.mrb[0].mxu0
    %v270 = vadd.f32 %v110, %v269
    %v271 = vpop.f32.mrb[0].mxu0
    %272 = vmatprep.mubr.bf16.mxu0 0
    %273 = vmatmul.mubr.bf16.gmra.mrb[0].mxu0 %v86
    %v274 = vpop.f32.mrb[0].mxu0
    %v275 = vadd.f32 %v110, %v274
    %v276 = vpop.f32.mrb[0].mxu0
    %v277 = vpop.f32.mrb[0].mxu0
    %v278 = vadd.f32 %v110, %v277
    %v279 = vpop.f32.mrb[0].mxu0
    %280 = vmatprep.mubr.bf16.mxu0 0
    %281 = vmatmul.mubr.bf16.gmra.mrb[0].mxu0 %v87
    %v282 = vpop.f32.mrb[0].mxu0
    %v283 = vadd.f32 %v110, %v282
    %v284 = vpop.f32.mrb[0].mxu0
    %v285 = vpop.f32.mrb[0].mxu0
    %v286 = vadd.f32 %v110, %v285
    %v287 = vpop.f32.mrb[0].mxu0
    %288 = vmatprep.mubr.bf16.mxu0 0
    %289 = vmatmul.mubr.bf16.gmra.mrb[0].mxu0 %v88
    %v290 = vpop.f32.mrb[0].mxu0
    %v291 = vadd.f32 %v110, %v290
    %v292 = vpop.f32.mrb[0].mxu0
    %v293 = vpop.f32.mrb[0].mxu0
    %v294 = vadd.f32 %v110, %v293
    %v295 = vpop.f32.mrb[0].mxu0
    %296 = vdwg.mxu0
    %v297 = vmul.f32 %v195, 0.5
    %v298 = vmul.f32 %v198, 0.5
    %v299 = vmul.f32 %v203, 0.5
    %v300 = vmul.f32 %v206, 0.5
    %v301 = vmul.f32 %v211, 0.5
    %v302 = vmul.f32 %v214, 0.5
    %v303 = vmul.f32 %v219, 0.5
    %v304 = vmul.f32 %v222, 0.5
    %v305 = vmul.f32 %v227, 0.5
    %v306 = vmul.f32 %v230, 0.5
    %v307 = vmul.f32 %v235, 0.5
    %v308 = vmul.f32 %v238, 0.5
    %v309 = vmul.f32 %v243, 0.5
    %v310 = vmul.f32 %v246, 0.5
    %v311 = vmul.f32 %v251, 0.5
    %v312 = vmul.f32 %v254, 0.5
    %v313 = vmul.f32 %v259, 0.5
    %v314 = vmul.f32 %v262, 0.5
    %v315 = vmul.f32 %v267, 0.5
    %v316 = vmul.f32 %v270, 0.5
    %v317 = vmul.f32 %v275, 0.5
    %v318 = vmul.f32 %v278, 0.5
    %v319 = vmul.f32 %v283, 0.5
    %v320 = vmul.f32 %v286, 0.5
    %v321 = vmul.f32 %v291, 0.5
    %v322 = vmul.f32 %v294, 0.5
    %v323 = vmul.f32 %v195, 0.044715
    %v324 = vmul.f32 %v198, 0.044715
    %v325 = vmul.f32 %v203, 0.044715
    %v326 = vmul.f32 %v206, 0.044715
    %v327 = vmul.f32 %v211, 0.044715
    %v328 = vmul.f32 %v214, 0.044715
    %v329 = vmul.f32 %v219, 0.044715
    %v330 = vmul.f32 %v222, 0.044715
    %v331 = vmul.f32 %v227, 0.044715
    %v332 = vmul.f32 %v230, 0.044715
    %v333 = vmul.f32 %v235, 0.044715
    %v334 = vmul.f32 %v238, 0.044715
    %v335 = vmul.f32 %v243, 0.044715
    %v336 = vmul.f32 %v246, 0.044715
    %v337 = vmul.f32 %v251, 0.044715
    %v338 = vmul.f32 %v254, 0.044715
    %v339 = vmul.f32 %v259, 0.044715
    %v340 = vmul.f32 %v262, 0.044715
    %v341 = vmul.f32 %v267, 0.044715
    %v342 = vmul.f32 %v270, 0.044715
    %v343 = vmul.f32 %v275, 0.044715
    %v344 = vmul.f32 %v278, 0.044715
    %v345 = vmul.f32 %v283, 0.044715
    %v346 = vmul.f32 %v286, 0.044715
    %v347 = vmul.f32 %v291, 0.044715
    %v348 = vmul.f32 %v294, 0.044715
    %v349 = vmul.f32 %v323, %v195
    %v350 = vmul.f32 %v324, %v198
    %v351 = vmul.f32 %v325, %v203
    %v352 = vmul.f32 %v326, %v206
    %v353 = vmul.f32 %v327, %v211
    %v354 = vmul.f32 %v328, %v214
    %v355 = vmul.f32 %v329, %v219
    %v356 = vmul.f32 %v330, %v222
    %v357 = vmul.f32 %v331, %v227
    %v358 = vmul.f32 %v332, %v230
    %v359 = vmul.f32 %v333, %v235
    %v360 = vmul.f32 %v334, %v238
    %v361 = vmul.f32 %v335, %v243
    %v362 = vmul.f32 %v336, %v246
    %v363 = vmul.f32 %v337, %v251
    %v364 = vmul.f32 %v338, %v254
    %v365 = vmul.f32 %v339, %v259
    %v366 = vmul.f32 %v340, %v262
    %v367 = vmul.f32 %v341, %v267
    %v368 = vmul.f32 %v342, %v270
    %v369 = vmul.f32 %v343, %v275
    %v370 = vmul.f32 %v344, %v278
    %v371 = vmul.f32 %v345, %v283
    %v372 = vmul.f32 %v346, %v286
    %v373 = vmul.f32 %v347, %v291
    %v374 = vmul.f32 %v348, %v294
    %v375 = vmul.f32 %v349, %v195
    %v376 = vmul.f32 %v350, %v198
    %v377 = vmul.f32 %v351, %v203
    %v378 = vmul.f32 %v352, %v206
    %v379 = vmul.f32 %v353, %v211
    %v380 = vmul.f32 %v354, %v214
    %v381 = vmul.f32 %v355, %v219
    %v382 = vmul.f32 %v356, %v222
    %v383 = vmul.f32 %v357, %v227
    %v384 = vmul.f32 %v358, %v230
    %v385 = vmul.f32 %v359, %v235
    %v386 = vmul.f32 %v360, %v238
    %v387 = vmul.f32 %v361, %v243
    %v388 = vmul.f32 %v362, %v246
    %v389 = vmul.f32 %v363, %v251
    %v390 = vmul.f32 %v364, %v254
    %v391 = vmul.f32 %v365, %v259
    %v392 = vmul.f32 %v366, %v262
    %v393 = vmul.f32 %v367, %v267
    %v394 = vmul.f32 %v368, %v270
    %v395 = vmul.f32 %v369, %v275
    %v396 = vmul.f32 %v370, %v278
    %v397 = vmul.f32 %v371, %v283
    %v398 = vmul.f32 %v372, %v286
    %v399 = vmul.f32 %v373, %v291
    %v400 = vmul.f32 %v374, %v294
    %v401 = vadd.f32 %v195, %v375
    %v402 = vadd.f32 %v198, %v376
    %v403 = vadd.f32 %v203, %v377
    %v404 = vadd.f32 %v206, %v378
    %v405 = vadd.f32 %v211, %v379
    %v406 = vadd.f32 %v214, %v380
    %v407 = vadd.f32 %v219, %v381
    %v408 = vadd.f32 %v222, %v382
    %v409 = vadd.f32 %v227, %v383
    %v410 = vadd.f32 %v230, %v384
    %v411 = vadd.f32 %v235, %v385
    %v412 = vadd.f32 %v238, %v386
    %v413 = vadd.f32 %v243, %v387
    %v414 = vadd.f32 %v246, %v388
    %v415 = vadd.f32 %v251, %v389
    %v416 = vadd.f32 %v254, %v390
    %v417 = vadd.f32 %v259, %v391
    %v418 = vadd.f32 %v262, %v392
    %v419 = vadd.f32 %v267, %v393
    %v420 = vadd.f32 %v270, %v394
    %v421 = vadd.f32 %v275, %v395
    %v422 = vadd.f32 %v278, %v396
    %v423 = vadd.f32 %v283, %v397
    %v424 = vadd.f32 %v286, %v398
    %v425 = vadd.f32 %v291, %v399
    %v426 = vadd.f32 %v294, %v400
    %v427 = vmul.f32 %v401, 0.7978846
    %v428 = vmul.f32 %v402, 0.7978846
    %v429 = vmul.f32 %v403, 0.7978846
    %v430 = vmul.f32 %v404, 0.7978846
    %v431 = vmul.f32 %v405, 0.7978846
    %v432 = vmul.f32 %v406, 0.7978846
    %v433 = vmul.f32 %v407, 0.7978846
    %v434 = vmul.f32 %v408, 0.7978846
    %v435 = vmul.f32 %v409, 0.7978846
    %v436 = vmul.f32 %v410, 0.7978846
    %v437 = vmul.f32 %v411, 0.7978846
    %v438 = vmul.f32 %v412, 0.7978846
    %v439 = vmul.f32 %v413, 0.7978846
    %v440 = vmul.f32 %v414, 0.7978846
    %v441 = vmul.f32 %v415, 0.7978846
    %v442 = vmul.f32 %v416, 0.7978846
    %v443 = vmul.f32 %v417, 0.7978846
    %v444 = vmul.f32 %v418, 0.7978846
    %v445 = vmul.f32 %v419, 0.7978846
    %v446 = vmul.f32 %v420, 0.7978846
    %v447 = vmul.f32 %v421, 0.7978846
    %v448 = vmul.f32 %v422, 0.7978846
    %v449 = vmul.f32 %v423, 0.7978846
    %v450 = vmul.f32 %v424, 0.7978846
    %v451 = vmul.f32 %v425, 0.7978846
    %v452 = vmul.f32 %v426, 0.7978846
    %v453 = vtanh.pop %v427
    %v454 = vtanh.pop %v428
    %v455 = vtanh.pop %v429
    %v456 = vtanh.pop %v430
    %v457 = vtanh.pop %v431
    %v458 = vtanh.pop %v432
    %v459 = vtanh.pop %v433
    %v460 = vtanh.pop %v434
    %v461 = vtanh.pop %v435
    %v462 = vtanh.pop %v436
    %v463 = vtanh.pop %v437
    %v464 = vtanh.pop %v438
    %v465 = vtanh.pop %v439
    %v466 = vtanh.pop %v440
    %v467 = vtanh.pop %v441
    %v468 = vtanh.pop %v442
    %v469 = vtanh.pop %v443
    %v470 = vtanh.pop %v444
    %v471 = vtanh.pop %v445
    %v472 = vtanh.pop %v446
    %v473 = vtanh.pop %v447
    %v474 = vtanh.pop %v448
    %v475 = vtanh.pop %v449
    %v476 = vtanh.pop %v450
    %v477 = vtanh.pop %v451
    %v478 = vtanh.pop %v452
    %v479 = vadd.f32 %v453, 1.0
    %v480 = vadd.f32 %v454, 1.0
    %v481 = vadd.f32 %v455, 1.0
    %v482 = vadd.f32 %v456, 1.0
    %v483 = vadd.f32 %v457, 1.0
    %v484 = vadd.f32 %v458, 1.0
    %v485 = vadd.f32 %v459, 1.0
    %v486 = vadd.f32 %v460, 1.0
    %v487 = vadd.f32 %v461, 1.0
    %v488 = vadd.f32 %v462, 1.0
    %v489 = vadd.f32 %v463, 1.0
    %v490 = vadd.f32 %v464, 1.0
    %v491 = vadd.f32 %v465, 1.0
    %v492 = vadd.f32 %v466, 1.0
    %v493 = vadd.f32 %v467, 1.0
    %v494 = vadd.f32 %v468, 1.0
    %v495 = vadd.f32 %v469, 1.0
    %v496 = vadd.f32 %v470, 1.0
    %v497 = vadd.f32 %v471, 1.0
    %v498 = vadd.f32 %v472, 1.0
    %v499 = vadd.f32 %v473, 1.0
    %v500 = vadd.f32 %v474, 1.0
    %v501 = vadd.f32 %v475, 1.0
    %v502 = vadd.f32 %v476, 1.0
    %v503 = vadd.f32 %v477, 1.0
    %v504 = vadd.f32 %v478, 1.0
    %v505 = vmul.f32 %v297, %v479
    %v506 = vmul.f32 %v298, %v480
    %v507 = vmul.f32 %v299, %v481
    %v508 = vmul.f32 %v300, %v482
    %v509 = vmul.f32 %v301, %v483
    %v510 = vmul.f32 %v302, %v484
    %v511 = vmul.f32 %v303, %v485
    %v512 = vmul.f32 %v304, %v486
    %v513 = vmul.f32 %v305, %v487
    %v514 = vmul.f32 %v306, %v488
    %v515 = vmul.f32 %v307, %v489
    %v516 = vmul.f32 %v308, %v490
    %v517 = vmul.f32 %v309, %v491
    %v518 = vmul.f32 %v310, %v492
    %v519 = vmul.f32 %v311, %v493
    %v520 = vmul.f32 %v312, %v494
    %v521 = vmul.f32 %v313, %v495
    %v522 = vmul.f32 %v314, %v496
    %v523 = vmul.f32 %v315, %v497
    %v524 = vmul.f32 %v316, %v498
    %v525 = vmul.f32 %v317, %v499
    %v526 = vmul.f32 %v318, %v500
    %v527 = vmul.f32 %v319, %v501
    %v528 = vmul.f32 %v320, %v502
    %v529 = vmul.f32 %v321, %v503
    %v530 = vmul.f32 %v322, %v504
    %v531 = vld [vmem:[%s3] sm:$0x1]
    %v532 = vld [vmem:[%s4] sm:$0x1]
    %533 = vadd.xlane.f32.xlu0 %v505
    %v534 = vpop.xlane.xlu0 %533
    %535 = vadd.xlane.f32.xlu0 %v506
    %v536 = vpop.xlane.xlu0 %535
    %537 = vadd.xlane.f32.xlu0 %v507
    %v538 = vpop.xlane.xlu0 %537
    %539 = vadd.xlane.f32.xlu0 %v508
    %v540 = vpop.xlane.xlu0 %539
    %541 = vadd.xlane.f32.xlu0 %v509
    %v542 = vpop.xlane.xlu0 %541
    %543 = vadd.xlane.f32.xlu0 %v510
    %v544 = vpop.xlane.xlu0 %543
    %545 = vadd.xlane.f32.xlu0 %v511
    %v546 = vpop.xlane.xlu0 %545
    %547 = vadd.xlane.f32.xlu0 %v512
    %v548 = vpop.xlane.xlu0 %547
    %549 = vadd.xlane.f32.xlu0 %v513
    %v550 = vpop.xlane.xlu0 %549
    %551 = vadd.xlane.f32.xlu0 %v514
    %v552 = vpop.xlane.xlu0 %551
    %553 = vadd.xlane.f32.xlu0 %v515
    %v554 = vpop.xlane.xlu0 %553
    %555 = vadd.xlane.f32.xlu0 %v516
    %v556 = vpop.xlane.xlu0 %555
    %557 = vadd.xlane.f32.xlu0 %v517
    %v558 = vpop.xlane.xlu0 %557
    %559 = vadd.xlane.f32.xlu0 %v518
    %v560 = vpop.xlane.xlu0 %559
    %561 = vadd.xlane.f32.xlu0 %v519
    %v562 = vpop.xlane.xlu0 %561
    %563 = vadd.xlane.f32.xlu0 %v520
    %v564 = vpop.xlane.xlu0 %563
    %565 = vadd.xlane.f32.xlu0 %v521
    %v566 = vpop.xlane.xlu0 %565
    %567 = vadd.xlane.f32.xlu0 %v522
    %v568 = vpop.xlane.xlu0 %567
    %569 = vadd.xlane.f32.xlu0 %v523
    %v570 = vpop.xlane.xlu0 %569
    %571 = vadd.xlane.f32.xlu0 %v524
    %v572 = vpop.xlane.xlu0 %571
    %573 = vadd.xlane.f32.xlu0 %v525
    %v574 = vpop.xlane.xlu0 %573
    %575 = vadd.xlane.f32.xlu0 %v526
    %v576 = vpop.xlane.xlu0 %575
    %577 = vadd.xlane.f32.xlu0 %v527
    %v578 = vpop.xlane.xlu0 %577
    %579 = vadd.xlane.f32.xlu0 %v528
    %v580 = vpop.xlane.xlu0 %579
    %581 = vadd.xlane.f32.xlu0 %v529
    %v582 = vpop.xlane.xlu0 %581
    %583 = vadd.xlane.f32.xlu0 %v530
    %v584 = vpop.xlane.xlu0 %583
    %v585 = vrcp.pop 128.0
    %v586 = vmul.f32 %v534, %v585
    %v587 = vmul.f32 %v536, %v585
    %v588 = vmul.f32 %v538, %v585
    %v589 = vmul.f32 %v540, %v585
    %v590 = vmul.f32 %v542, %v585
    %v591 = vmul.f32 %v544, %v585
    %v592 = vmul.f32 %v546, %v585
    %v593 = vmul.f32 %v548, %v585
    %v594 = vmul.f32 %v550, %v585
    %v595 = vmul.f32 %v552, %v585
    %v596 = vmul.f32 %v554, %v585
    %v597 = vmul.f32 %v556, %v585
    %v598 = vmul.f32 %v558, %v585
    %v599 = vmul.f32 %v560, %v585
    %v600 = vmul.f32 %v562, %v585
    %v601 = vmul.f32 %v564, %v585
    %v602 = vmul.f32 %v566, %v585
    %v603 = vmul.f32 %v568, %v585
    %v604 = vmul.f32 %v570, %v585
    %v605 = vmul.f32 %v572, %v585
    %v606 = vmul.f32 %v574, %v585
    %v607 = vmul.f32 %v576, %v585
    %v608 = vmul.f32 %v578, %v585
    %v609 = vmul.f32 %v580, %v585
    %v610 = vmul.f32 %v582, %v585
    %v611 = vmul.f32 %v584, %v585
    %v612 = vsub.f32 %v505, %v586
    %v613 = vsub.f32 %v506, %v587
    %v614 = vsub.f32 %v507, %v588
    %v615 = vsub.f32 %v508, %v589
    %v616 = vsub.f32 %v509, %v590
    %v617 = vsub.f32 %v510, %v591
    %v618 = vsub.f32 %v511, %v592
    %v619 = vsub.f32 %v512, %v593
    %v620 = vsub.f32 %v513, %v594
    %v621 = vsub.f32 %v514, %v595
    %v622 = vsub.f32 %v515, %v596
    %v623 = vsub.f32 %v516, %v597
    %v624 = vsub.f32 %v517, %v598
    %v625 = vsub.f32 %v518, %v599
    %v626 = vsub.f32 %v519, %v600
    %v627 = vsub.f32 %v520, %v601
    %v628 = vsub.f32 %v521, %v602
    %v629 = vsub.f32 %v522, %v603
    %v630 = vsub.f32 %v523, %v604
    %v631 = vsub.f32 %v524, %v605
    %v632 = vsub.f32 %v525, %v606
    %v633 = vsub.f32 %v526, %v607
    %v634 = vsub.f32 %v527, %v608
    %v635 = vsub.f32 %v528, %v609
    %v636 = vsub.f32 %v529, %v610
    %v637 = vsub.f32 %v530, %v611
    %v638 = vmul.f32 %v612, %v612
    %v639 = vmul.f32 %v613, %v613
    %v640 = vmul.f32 %v614, %v614
    %v641 = vmul.f32 %v615, %v615
    %v642 = vmul.f32 %v616, %v616
    %v643 = vmul.f32 %v617, %v617
    %v644 = vmul.f32 %v618, %v618
    %v645 = vmul.f32 %v619, %v619
    %v646 = vmul.f32 %v620, %v620
    %v647 = vmul.f32 %v621, %v621
    %v648 = vmul.f32 %v622, %v622
    %v649 = vmul.f32 %v623, %v623
    %v650 = vmul.f32 %v624, %v624
    %v651 = vmul.f32 %v625, %v625
    %v652 = vmul.f32 %v626, %v626
    %v653 = vmul.f32 %v627, %v627
    %v654 = vmul.f32 %v628, %v628
    %v655 = vmul.f32 %v629, %v629
    %v656 = vmul.f32 %v630, %v630
    %v657 = vmul.f32 %v631, %v631
    %v658 = vmul.f32 %v632, %v632
    %v659 = vmul.f32 %v633, %v633
    %v660 = vmul.f32 %v634, %v634
    %v661 = vmul.f32 %v635, %v635
    %v662 = vmul.f32 %v636, %v636
    %v663 = vmul.f32 %v637, %v637
    %664 = vadd.xlane.f32.xlu0 %v638
    %v665 = vpop.xlane.xlu0 %664
    %666 = vadd.xlane.f32.xlu0 %v639
    %v667 = vpop.xlane.xlu0 %666
    %668 = vadd.xlane.f32.xlu0 %v640
    %v669 = vpop.xlane.xlu0 %668
    %670 = vadd.xlane.f32.xlu0 %v641
    %v671 = vpop.xlane.xlu0 %670
    %672 = vadd.xlane.f32.xlu0 %v642
    %v673 = vpop.xlane.xlu0 %672
    %674 = vadd.xlane.f32.xlu0 %v643
    %v675 = vpop.xlane.xlu0 %674
    %676 = vadd.xlane.f32.xlu0 %v644
    %v677 = vpop.xlane.xlu0 %676
    %678 = vadd.xlane.f32.xlu0 %v645
    %v679 = vpop.xlane.xlu0 %678
    %680 = vadd.xlane.f32.xlu0 %v646
    %v681 = vpop.xlane.xlu0 %680
    %682 = vadd.xlane.f32.xlu0 %v647
    %v683 = vpop.xlane.xlu0 %682
    %684 = vadd.xlane.f32.xlu0 %v648
    %v685 = vpop.xlane.xlu0 %684
    %686 = vadd.xlane.f32.xlu0 %v649
    %v687 = vpop.xlane.xlu0 %686
    %688 = vadd.xlane.f32.xlu0 %v650
    %v689 = vpop.xlane.xlu0 %688
    %690 = vadd.xlane.f32.xlu0 %v651
    %v691 = vpop.xlane.xlu0 %690
    %692 = vadd.xlane.f32.xlu0 %v652
    %v693 = vpop.xlane.xlu0 %692
    %694 = vadd.xlane.f32.xlu0 %v653
    %v695 = vpop.xlane.xlu0 %694
    %696 = vadd.xlane.f32.xlu0 %v654
    %v697 = vpop.xlane.xlu0 %696
    %698 = vadd.xlane.f32.xlu0 %v655
    %v699 = vpop.xlane.xlu0 %698
    %700 = vadd.xlane.f32.xlu0 %v656
    %v701 = vpop.xlane.xlu0 %700
    %702 = vadd.xlane.f32.xlu0 %v657
    %v703 = vpop.xlane.xlu0 %702
    %704 = vadd.xlane.f32.xlu0 %v658
    %v705 = vpop.xlane.xlu0 %704
    %706 = vadd.xlane.f32.xlu0 %v659
    %v707 = vpop.xlane.xlu0 %706
    %708 = vadd.xlane.f32.xlu0 %v660
    %v709 = vpop.xlane.xlu0 %708
    %710 = vadd.xlane.f32.xlu0 %v661
    %v711 = vpop.xlane.xlu0 %710
    %712 = vadd.xlane.f32.xlu0 %v662
    %v713 = vpop.xlane.xlu0 %712
    %714 = vadd.xlane.f32.xlu0 %v663
    %v715 = vpop.xlane.xlu0 %714
    %v716 = vmul.f32 %v665, %v585
    %v717 = vmul.f32 %v667, %v585
    %v718 = vmul.f32 %v669, %v585
    %v719 = vmul.f32 %v671, %v585
    %v720 = vmul.f32 %v673, %v585
    %v721 = vmul.f32 %v675, %v585
    %v722 = vmul.f32 %v677, %v585
    %v723 = vmul.f32 %v679, %v585
    %v724 = vmul.f32 %v681, %v585
    %v725 = vmul.f32 %v683, %v585
    %v726 = vmul.f32 %v685, %v585
    %v727 = vmul.f32 %v687, %v585
    %v728 = vmul.f32 %v689, %v585
    %v729 = vmul.f32 %v691, %v585
    %v730 = vmul.f32 %v693, %v585
    %v731 = vmul.f32 %v695, %v585
    %v732 = vmul.f32 %v697, %v585
    %v733 = vmul.f32 %v699, %v585
    %v734 = vmul.f32 %v701, %v585
    %v735 = vmul.f32 %v703, %v585
    %v736 = vmul.f32 %v705, %v585
    %v737 = vmul.f32 %v707, %v585
    %v738 = vmul.f32 %v709, %v585
    %v739 = vmul.f32 %v711, %v585
    %v740 = vmul.f32 %v713, %v585
    %v741 = vmul.f32 %v715, %v585
    %v742 = vadd.f32 %v716, 1e-05
    %v743 = vadd.f32 %v717, 1e-05
    %v744 = vadd.f32 %v718, 1e-05
    %v745 = vadd.f32 %v719, 1e-05
    %v746 = vadd.f32 %v720, 1e-05
    %v747 = vadd.f32 %v721, 1e-05
    %v748 = vadd.f32 %v722, 1e-05
    %v749 = vadd.f32 %v723, 1e-05
    %v750 = vadd.f32 %v724, 1e-05
    %v751 = vadd.f32 %v725, 1e-05
    %v752 = vadd.f32 %v726, 1e-05
    %v753 = vadd.f32 %v727, 1e-05
    %v754 = vadd.f32 %v728, 1e-05
    %v755 = vadd.f32 %v729, 1e-05
    %v756 = vadd.f32 %v730, 1e-05
    %v757 = vadd.f32 %v731, 1e-05
    %v758 = vadd.f32 %v732, 1e-05
    %v759 = vadd.f32 %v733, 1e-05
    %v760 = vadd.f32 %v734, 1e-05
    %v761 = vadd.f32 %v735, 1e-05
    %v762 = vadd.f32 %v736, 1e-05
    %v763 = vadd.f32 %v737, 1e-05
    %v764 = vadd.f32 %v738, 1e-05
    %v765 = vadd.f32 %v739, 1e-05
    %v766 = vadd.f32 %v740, 1e-05
    %v767 = vadd.f32 %v741, 1e-05
    %v768 = vrsqrt.pop %v742
    %v769 = vrsqrt.pop %v743
    %v770 = vrsqrt.pop %v744
    %v771 = vrsqrt.pop %v745
    %v772 = vrsqrt.pop %v746
    %v773 = vrsqrt.pop %v747
    %v774 = vrsqrt.pop %v748
    %v775 = vrsqrt.pop %v749
    %v776 = vrsqrt.pop %v750
    %v777 = vrsqrt.pop %v751
    %v778 = vrsqrt.pop %v752
    %v779 = vrsqrt.pop %v753
    %v780 = vrsqrt.pop %v754
    %v781 = vrsqrt.pop %v755
    %v782 = vrsqrt.pop %v756
    %v783 = vrsqrt.pop %v757
    %v784 = vrsqrt.pop %v758
    %v785 = vrsqrt.pop %v759
    %v786 = vrsqrt.pop %v760
    %v787 = vrsqrt.pop %v761
    %v788 = vrsqrt.pop %v762
    %v789 = vrsqrt.pop %v763
    %v790 = vrsqrt.pop %v764
    %v791 = vrsqrt.pop %v765
    %v792 = vrsqrt.pop %v766
    %v793 = vrsqrt.pop %v767
    %v794 = vmul.f32 %v612, %v768
    %v795 = vmul.f32 %v613, %v769
    %v796 = vmul.f32 %v614, %v770
    %v797 = vmul.f32 %v615, %v771
    %v798 = vmul.f32 %v616, %v772
    %v799 = vmul.f32 %v617, %v773
    %v800 = vmul.f32 %v618, %v774
    %v801 = vmul.f32 %v619, %v775
    %v802 = vmul.f32 %v620, %v776
    %v803 = vmul.f32 %v621, %v777
    %v804 = vmul.f32 %v622, %v778
    %v805 = vmul.f32 %v623, %v779
    %v806 = vmul.f32 %v624, %v780
    %v807 = vmul.f32 %v625, %v781
    %v808 = vmul.f32 %v626, %v782
    %v809 = vmul.f32 %v627, %v783
    %v810 = vmul.f32 %v628, %v784
    %v811 = vmul.f32 %v629, %v785
    %v812 = vmul.f32 %v630, %v786
    %v813 = vmul.f32 %v631, %v787
    %v814 = vmul.f32 %v632, %v788
    %v815 = vmul.f32 %v633, %v789
    %v816 = vmul.f32 %v634, %v790
    %v817 = vmul.f32 %v635, %v791
    %v818 = vmul.f32 %v636, %v792
    %v819 = vmul.f32 %v637, %v793
    %v821 = vlaneseq
    %v822 = vshrl.u32 %v821, 7
    %v823 = vsub.s32 0, %v822
    %v824 = vrot.slane %v531, %v823
    %v826 = vmul.f32 %v794, %v824
    %v827 = vmul.f32 %v795, %v824
    %v828 = vmul.f32 %v796, %v824
    %v829 = vmul.f32 %v797, %v824
    %v830 = vmul.f32 %v798, %v824
    %v831 = vmul.f32 %v799, %v824
    %v832 = vmul.f32 %v800, %v824
    %v833 = vmul.f32 %v801, %v824
    %v834 = vmul.f32 %v802, %v824
    %v835 = vmul.f32 %v803, %v824
    %v836 = vmul.f32 %v804, %v824
    %v837 = vmul.f32 %v805, %v824
    %v838 = vmul.f32 %v806, %v824
    %v839 = vmul.f32 %v807, %v824
    %v840 = vmul.f32 %v808, %v824
    %v841 = vmul.f32 %v809, %v824
    %v842 = vmul.f32 %v810, %v824
    %v843 = vmul.f32 %v811, %v824
    %v844 = vmul.f32 %v812, %v824
    %v845 = vmul.f32 %v813, %v824
    %v846 = vmul.f32 %v814, %v824
    %v847 = vmul.f32 %v815, %v824
    %v848 = vmul.f32 %v816, %v824
    %v849 = vmul.f32 %v817, %v824
    %v850 = vmul.f32 %v818, %v824
    %v851 = vmul.f32 %v819, %v824
    %v853 = vlaneseq
    %v854 = vshrl.u32 %v853, 7
    %v855 = vsub.s32 0, %v854
    %v856 = vrot.slane %v532, %v855
    %v858 = vadd.f32 %v826, %v856
    %v859 = vadd.f32 %v827, %v856
    %v860 = vadd.f32 %v828, %v856
    %v861 = vadd.f32 %v829, %v856
    %v862 = vadd.f32 %v830, %v856
    %v863 = vadd.f32 %v831, %v856
    %v864 = vadd.f32 %v832, %v856
    %v865 = vadd.f32 %v833, %v856
    %v866 = vadd.f32 %v834, %v856
    %v867 = vadd.f32 %v835, %v856
    %v868 = vadd.f32 %v836, %v856
    %v869 = vadd.f32 %v837, %v856
    %v870 = vadd.f32 %v838, %v856
    %v871 = vadd.f32 %v839, %v856
    %v872 = vadd.f32 %v840, %v856
    %v873 = vadd.f32 %v841, %v856
    %v874 = vadd.f32 %v842, %v856
    %v875 = vadd.f32 %v843, %v856
    %v876 = vadd.f32 %v844, %v856
    %v877 = vadd.f32 %v845, %v856
    %v878 = vadd.f32 %v846, %v856
    %v879 = vadd.f32 %v847, %v856
    %v880 = vadd.f32 %v848, %v856
    %v881 = vadd.f32 %v849, %v856
    %v882 = vadd.f32 %v850, %v856
    %v883 = vadd.f32 %v851, %v856
    %884 = vst [vmem:[#allocation7] sm:$0xff] %v858
    %885 = vst [vmem:[#allocation7 + $0x8] sm:$0xff] %v859
    %886 = vst [vmem:[#allocation7 + $0x10] sm:$0xff] %v860
    %887 = vst [vmem:[#allocation7 + $0x18] sm:$0xff] %v861
    %888 = vst [vmem:[#allocation7 + $0x20] sm:$0xff] %v862
    %889 = vst [vmem:[#allocation7 + $0x28] sm:$0xff] %v863
    %890 = vst [vmem:[#allocation7 + $0x30] sm:$0xff] %v864
    %891 = vst [vmem:[#allocation7 + $0x38] sm:$0xff] %v865
    %892 = vst [vmem:[#allocation7 + $0x40] sm:$0xff] %v866
    %893 = vst [vmem:[#allocation7 + $0x48] sm:$0xff] %v867
    %894 = vst [vmem:[#allocation7 + $0x50] sm:$0xff] %v868
    %895 = vst [vmem:[#allocation7 + $0x58] sm:$0xff] %v869
    %896 = vst [vmem:[#allocation7 + $0x60] sm:$0xff] %v870
    %897 = vst [vmem:[#allocation7 + $0x68] sm:$0xff] %v871
    %898 = vst [vmem:[#allocation7 + $0x70] sm:$0xff] %v872
    %899 = vst [vmem:[#allocation7 + $0x78] sm:$0xff] %v873
    %900 = vst [vmem:[#allocation7 + $0x80] sm:$0xff] %v874
    %901 = vst [vmem:[#allocation7 + $0x88] sm:$0xff] %v875
    %902 = vst [vmem:[#allocation7 + $0x90] sm:$0xff] %v876
    %903 = vst [vmem:[#allocation7 + $0x98] sm:$0xff] %v877
    %904 = vst [vmem:[#allocation7 + $0xa0] sm:$0xff] %v878
    %905 = vst [vmem:[#allocation7 + $0xa8] sm:$0xff] %v879
    %906 = vst [vmem:[#allocation7 + $0xb0] sm:$0xff] %v880
    %907 = vst [vmem:[#allocation7 + $0xb8] sm:$0xff] %v881
    %908 = vst [vmem:[#allocation7 + $0xc0] sm:$0xff] %v882
    %909 = vst [vmem:[#allocation7 + $0xc8] sm:$0xff] %v883
    // Predicated region
    $region30: #{tpu_custom_call.1} parent=1 // pred_check
      _
    $region31: #{tpu_custom_call.1} parent=1 // pred_check_branch
      %911 = sbr.rel (0) target = $region33
    $region32: #{tpu_custom_call.1} parent=1 // pred_region
      %s913 = ssub.s32 3328, 3328
      %914 = vsyncadd [#allocation4], %s913
      %s915 = sshll.u32 [#allocation7], 4
      %s916 = int_to_ptr.vmem [resolvable:$true] %s915
      %921 = dma.vmem_to_hbm [thread:$0]  %s916, 3328, %s5, [#allocation4], 128, 128, 8
    $region33: #{tpu_custom_call.1} parent=1 // pred_fallthru
      _
    // Predicated region
    $region34: #{tpu_custom_call.1} parent=1 // pred_check
      _
    $region35: #{tpu_custom_call.1} parent=1 // pred_check_branch
      %923 = sbr.rel (0) target = $region37
    $region36: #{tpu_custom_call.1} parent=1 // pred_region
      %924 = dma.done [#allocation4], 3328
    $region37: #{tpu_custom_call.1} parent=1 // pred_fallthru
      _
    %925 = vsyncpa [#allocation3], 1
    %926 = vsyncpa [#allocation6], 1
    %927 = vsyncpa [#allocation4], 1

</llo_original>
